<compile_context>
chip_gen: v7x
topology: tpu7x:2x2x1
jax: 0.10.0
libtpu: 0.0.40
codegen_flags: <defaults>
</compile_context>

<pallas_src>
import jax
import jax.numpy as jnp
from jax.experimental import pallas as pl
from jax.experimental.pallas import tpu as pltpu

_LANE = 128
_SUBLANE = 8


def _round_up(n, m):
    return ((n + m - 1) // m) * m


def _pad_lanes(v, target_lanes):
    """Pad the last dim of a 2-D value up to `target_lanes` with zeros."""
    d = v.shape[-1]
    if d == target_lanes:
        return v
    pad = jnp.zeros((v.shape[0], target_lanes - d), dtype=v.dtype)
    return jnp.concatenate([v, pad], axis=-1)


def _spad_kernel(x_ref, w1_ref, b1_ref, w2_ref, b2_ref, w3_ref, b3_ref,
                 o1_ref, o2_ref, o3_ref):
    """Fused 3-layer MLP over one (TILE_B, D0) batch tile."""
    neg_slope = jnp.float32(0.01)  # nn.LeakyReLU default

    def leaky(v):
        return jnp.where(v >= 0, v, v * neg_slope)

    x = x_ref[...]
    # Read each bias once per tile; single broadcast per add.
    b1 = b1_ref[...]
    b2 = b2_ref[...]
    b3 = b3_ref[...]

    # Layer 1 (pre-activation stored, activation fed forward)
    x1 = jnp.dot(x, w1_ref[...], preferred_element_type=jnp.float32) + b1
    o1_ref[...] = _pad_lanes(x1, o1_ref.shape[-1]).astype(o1_ref.dtype)

    # Layer 2
    x2 = jnp.dot(leaky(x1), w2_ref[...], preferred_element_type=jnp.float32) + b2
    o2_ref[...] = _pad_lanes(x2, o2_ref.shape[-1]).astype(o2_ref.dtype)

    # Layer 3
    x3 = jnp.dot(leaky(x2), w3_ref[...], preferred_element_type=jnp.float32) + b3
    o3_ref[...] = _pad_lanes(x3, o3_ref.shape[-1]).astype(o3_ref.dtype)


def spad_layer_forward(x, params, *, tile_b=1024):
    """x: (B, D0) float32. params: dict with w1,b1,w2,b2,w3,b3.

    Returns [x1, x2, x3], each (B, Di, 1, 1): pre-activation linear outputs,
    matching the PyTorch module.
    """
    w1, b1 = params["w1"], params["b1"]
    w2, b2 = params["w2"], params["b2"]
    w3, b3 = params["w3"], params["b3"]

    B, D0 = x.shape
    D1, D2, D3 = w1.shape[1], w2.shape[1], w3.shape[1]
    # Lane-dense output widths (multiples of 128).
    Dp1, Dp2, Dp3 = (_round_up(d, _LANE) for d in (D1, D2, D3))

    # Batch tiling: tile must be a multiple of 8 sublanes; for small B the
    # tile covers the whole (padded) batch in one grid step.
    tile_b = min(tile_b, _round_up(B, _SUBLANE))
    tile_b = _round_up(tile_b, _SUBLANE)
    Bp = _round_up(B, tile_b)
    if Bp != B:
        x = jnp.pad(x, ((0, Bp - B), (0, 0)))
    grid = (Bp // tile_b,)

    flops = 2 * B * (D0 * D1 + D1 * D2 + D2 * D3)
    bytes_accessed = 4 * (
        B * D0 + B * (D1 + D2 + D3)
        + D0 * D1 + D1 * D2 + D2 * D3 + D1 + D2 + D3
    )
    cost = pl.CostEstimate(flops=flops, transcendentals=0,
                           bytes_accessed=bytes_accessed)

    batched = lambda i: (i, 0)   # x / output tiles walk the batch axis
    resident = lambda i: (0, 0)  # weights & biases stay put across tiles

    o1, o2, o3 = pl.pallas_call(
        _spad_kernel,
        grid=grid,
        out_shape=(
            jax.ShapeDtypeStruct((Bp, Dp1), jnp.float32),
            jax.ShapeDtypeStruct((Bp, Dp2), jnp.float32),
            jax.ShapeDtypeStruct((Bp, Dp3), jnp.float32),
        ),
        in_specs=[
            pl.BlockSpec((tile_b, D0), batched),
            pl.BlockSpec((D0, D1), resident),
            pl.BlockSpec((1, D1), resident),
            pl.BlockSpec((D1, D2), resident),
            pl.BlockSpec((1, D2), resident),
            pl.BlockSpec((D2, D3), resident),
            pl.BlockSpec((1, D3), resident),
        ],
        out_specs=(
            pl.BlockSpec((tile_b, Dp1), batched),
            pl.BlockSpec((tile_b, Dp2), batched),
            pl.BlockSpec((tile_b, Dp3), batched),
        ),
        compiler_params=pltpu.CompilerParams(
            dimension_semantics=("parallel",),       # shard batch tiles on v7x's 2 TCs
            vmem_limit_bytes=32 * 1024 * 1024,       # fits v7x's 64 MiB physical VMEM
        ),
        cost_estimate=cost,
    )(x, w1, b1.reshape(1, D1), w2, b2.reshape(1, D2), w3, b3.reshape(1, D3))

    # Strip batch/lane padding, restore (B, Di, 1, 1) like the PyTorch module.
    return [
        o1[:B, :D1].reshape(B, D1, 1, 1),
        o2[:B, :D2].reshape(B, D2, 1, 1),
        o3[:B, :D3].reshape(B, D3, 1, 1),
    ]


def _reference_forward(x, params):
    """Pure-JAX reference (mirrors the PyTorch forward)."""
    def leaky(v):
        return jnp.where(v >= 0, v, v * 0.01)
    x1 = x @ params["w1"] + params["b1"]
    x2 = leaky(x1) @ params["w2"] + params["b2"]
    x3 = leaky(x2) @ params["w3"] + params["b3"]
    b = x.shape[0]
    return [x1.reshape(b, -1, 1, 1), x2.reshape(b, -1, 1, 1), x3.reshape(b, -1, 1, 1)]


def init_params(key, spad_dim):
    """Deterministic init; weights stored as (D_in, D_out)."""
    d0, d1, d2, d3 = spad_dim
    k1, k2, k3, k4, k5, k6 = jax.random.split(key, 6)
    scale = 0.1
    return {
        "w1": scale * jax.random.normal(k1, (d0, d1), jnp.float32),
        "b1": scale * jax.random.normal(k2, (d1,), jnp.float32),
        "w2": scale * jax.random.normal(k3, (d1, d2), jnp.float32),
        "b2": scale * jax.random.normal(k4, (d2,), jnp.float32),
        "w3": scale * jax.random.normal(k5, (d2, d3), jnp.float32),
        "b3": scale * jax.random.normal(k6, (d3,), jnp.float32),
    }


if __name__ == "__main__":
    key = jax.random.PRNGKey(0)
    spad_dim = (32, 64, 128, 64)   # (D0, D1, D2, D3)
    batch = 8

    kx, kp = jax.random.split(key)
    x = jax.random.normal(kx, (batch, spad_dim[0]), jnp.float32)
    params = init_params(kp, spad_dim)

    outs = spad_layer_forward(x, params)
    outs = jax.block_until_ready(outs)

    refs = _reference_forward(x, params)
    for o, r in zip(outs, refs):
        assert o.shape == r.shape, (o.shape, r.shape)
        assert jnp.allclose(o, r, atol=1e-4, rtol=1e-4), float(jnp.max(jnp.abs(o - r)))

    # Also exercise the multi-tile path (B > tile) for pipelining coverage.
    big_b = 40
    xb = jax.random.normal(kx, (big_b, spad_dim[0]), jnp.float32)
    outs_b = jax.block_until_ready(spad_layer_forward(xb, params, tile_b=16))
    refs_b = _reference_forward(xb, params)
    for o, r in zip(outs_b, refs_b):
        assert o.shape == r.shape, (o.shape, r.shape)
        assert jnp.allclose(o, r, atol=1e-4, rtol=1e-4), float(jnp.max(jnp.abs(o - r)))

    print("KERNEL_OK")
</pallas_src>

<mosaic_0001>
module attributes {stable_mosaic.version = 11 : i64} {
  func.func @_spad_kernel(%arg0: i32, %arg1: memref<8x32xf32, #tpu.memory_space<vmem>>, %arg2: memref<32x64xf32, #tpu.memory_space<vmem>>, %arg3: memref<1x64xf32, #tpu.memory_space<vmem>>, %arg4: memref<64x128xf32, #tpu.memory_space<vmem>>, %arg5: memref<1x128xf32, #tpu.memory_space<vmem>>, %arg6: memref<128x64xf32, #tpu.memory_space<vmem>>, %arg7: memref<1x64xf32, #tpu.memory_space<vmem>>, %arg8: memref<8x128xf32, #tpu.memory_space<vmem>>, %arg9: memref<8x128xf32, #tpu.memory_space<vmem>>, %arg10: memref<8x128xf32, #tpu.memory_space<vmem>>) attributes {dimension_semantics = [#tpu.dimension_semantics<parallel>], iteration_bounds = array<i64: 1>, scalar_prefetch = 0 : i64, scratch_operands = 0 : i64, tpu.core_type = #tpu.core_type<tc>, window_params = [{transform_indices = @transform_0, window_bounds = array<i64: 8, 32>}, {pipeline_mode = #tpu.pipeline_mode<synchronous>, transform_indices = @transform_1, window_bounds = array<i64: 32, 64>}, {pipeline_mode = #tpu.pipeline_mode<synchronous>, transform_indices = @transform_2, window_bounds = array<i64: 1, 64>}, {pipeline_mode = #tpu.pipeline_mode<synchronous>, transform_indices = @transform_3, window_bounds = array<i64: 64, 128>}, {pipeline_mode = #tpu.pipeline_mode<synchronous>, transform_indices = @transform_4, window_bounds = array<i64: 1, 128>}, {pipeline_mode = #tpu.pipeline_mode<synchronous>, transform_indices = @transform_5, window_bounds = array<i64: 128, 64>}, {pipeline_mode = #tpu.pipeline_mode<synchronous>, transform_indices = @transform_6, window_bounds = array<i64: 1, 64>}, {transform_indices = @transform_7, window_bounds = array<i64: 8, 128>}, {transform_indices = @transform_8, window_bounds = array<i64: 8, 128>}, {transform_indices = @transform_9, window_bounds = array<i64: 8, 128>}]} {
    %c0 = arith.constant 0 : index
    %c0_0 = arith.constant 0 : index
    %0 = vector.load %arg1[%c0, %c0_0] : memref<8x32xf32, #tpu.memory_space<vmem>>, vector<8x32xf32>
    %c0_1 = arith.constant 0 : index
    %c0_2 = arith.constant 0 : index
    %1 = vector.load %arg3[%c0_1, %c0_2] : memref<1x64xf32, #tpu.memory_space<vmem>>, vector<1x64xf32>
    %c0_3 = arith.constant 0 : index
    %c0_4 = arith.constant 0 : index
    %2 = vector.load %arg5[%c0_3, %c0_4] : memref<1x128xf32, #tpu.memory_space<vmem>>, vector<1x128xf32>
    %c0_5 = arith.constant 0 : index
    %c0_6 = arith.constant 0 : index
    %3 = vector.load %arg7[%c0_5, %c0_6] : memref<1x64xf32, #tpu.memory_space<vmem>>, vector<1x64xf32>
    %c0_7 = arith.constant 0 : index
    %c0_8 = arith.constant 0 : index
    %4 = vector.load %arg2[%c0_7, %c0_8] : memref<32x64xf32, #tpu.memory_space<vmem>>, vector<32x64xf32>
    %cst = arith.constant dense<0.000000e+00> : vector<8x64xf32>
    %5 = tpu.matmul %0, %4, %cst {dimension_numbers = #tpu.dot_dimension_numbers<[1], [0], [0], [1], [0, 0, 1, 1], [], []>} : vector<8x32xf32>, vector<32x64xf32>, vector<8x64xf32> -> vector<8x64xf32>
    %6 = vector.broadcast %1 : vector<1x64xf32> to vector<8x64xf32>
    %7 = arith.addf %5, %6 : vector<8x64xf32>
    %cst_9 = arith.constant 0.000000e+00 : f32
    %8 = vector.broadcast %cst_9 : f32 to vector<8x64xf32>
    %9 = tpu.concatenate %7, %8 in 1 : vector<8x64xf32>, vector<8x64xf32> -> vector<8x128xf32>
    %c0_10 = arith.constant 0 : index
    %c0_11 = arith.constant 0 : index
    %10 = vector.load %arg8[%c0_10, %c0_11] : memref<8x128xf32, #tpu.memory_space<vmem>>, vector<8x128xf32>
    tpu.vector_store %arg8[%c0_10, %c0_11], %9 {strides = array<i32>} : memref<8x128xf32, #tpu.memory_space<vmem>>, vector<8x128xf32>,
    %cst_12 = arith.constant 0.000000e+00 : f32
    %11 = vector.broadcast %cst_12 : f32 to vector<8x64xf32>
    %12 = arith.cmpf oge, %7, %11 : vector<8x64xf32>
    %cst_13 = arith.constant 0.00999999977 : f32
    %13 = vector.broadcast %cst_13 : f32 to vector<8x64xf32>
    %14 = arith.mulf %7, %13 : vector<8x64xf32>
    %15 = arith.select %12, %7, %14 : vector<8x64xi1>, vector<8x64xf32>
    %c0_14 = arith.constant 0 : index
    %c0_15 = arith.constant 0 : index
    %16 = vector.load %arg4[%c0_14, %c0_15] : memref<64x128xf32, #tpu.memory_space<vmem>>, vector<64x128xf32>
    %cst_16 = arith.constant dense<0.000000e+00> : vector<8x128xf32>
    %17 = tpu.matmul %15, %16, %cst_16 {dimension_numbers = #tpu.dot_dimension_numbers<[1], [0], [0], [1], [0, 0, 1, 1], [], []>} : vector<8x64xf32>, vector<64x128xf32>, vector<8x128xf32> -> vector<8x128xf32>
    %18 = vector.broadcast %2 : vector<1x128xf32> to vector<8x128xf32>
    %19 = arith.addf %17, %18 : vector<8x128xf32>
    %c0_17 = arith.constant 0 : index
    %c0_18 = arith.constant 0 : index
    %20 = vector.load %arg9[%c0_17, %c0_18] : memref<8x128xf32, #tpu.memory_space<vmem>>, vector<8x128xf32>
    tpu.vector_store %arg9[%c0_17, %c0_18], %19 {strides = array<i32>} : memref<8x128xf32, #tpu.memory_space<vmem>>, vector<8x128xf32>,
    %cst_19 = arith.constant 0.000000e+00 : f32
    %21 = vector.broadcast %cst_19 : f32 to vector<8x128xf32>
    %22 = arith.cmpf oge, %19, %21 : vector<8x128xf32>
    %cst_20 = arith.constant 0.00999999977 : f32
    %23 = vector.broadcast %cst_20 : f32 to vector<8x128xf32>
    %24 = arith.mulf %19, %23 : vector<8x128xf32>
    %25 = arith.select %22, %19, %24 : vector<8x128xi1>, vector<8x128xf32>
    %c0_21 = arith.constant 0 : index
    %c0_22 = arith.constant 0 : index
    %26 = vector.load %arg6[%c0_21, %c0_22] : memref<128x64xf32, #tpu.memory_space<vmem>>, vector<128x64xf32>
    %cst_23 = arith.constant dense<0.000000e+00> : vector<8x64xf32>
    %27 = tpu.matmul %25, %26, %cst_23 {dimension_numbers = #tpu.dot_dimension_numbers<[1], [0], [0], [1], [0, 0, 1, 1], [], []>} : vector<8x128xf32>, vector<128x64xf32>, vector<8x64xf32> -> vector<8x64xf32>
    %28 = vector.broadcast %3 : vector<1x64xf32> to vector<8x64xf32>
    %29 = arith.addf %27, %28 : vector<8x64xf32>
    %cst_24 = arith.constant 0.000000e+00 : f32
    %30 = vector.broadcast %cst_24 : f32 to vector<8x64xf32>
    %31 = tpu.concatenate %29, %30 in 1 : vector<8x64xf32>, vector<8x64xf32> -> vector<8x128xf32>
    %c0_25 = arith.constant 0 : index
    %c0_26 = arith.constant 0 : index
    %32 = vector.load %arg10[%c0_25, %c0_26] : memref<8x128xf32, #tpu.memory_space<vmem>>, vector<8x128xf32>
    tpu.vector_store %arg10[%c0_25, %c0_26], %31 {strides = array<i32>} : memref<8x128xf32, #tpu.memory_space<vmem>>, vector<8x128xf32>,
    return
  }
  func.func @transform_0(%arg0: i32) -> (i32, i32) {
    %c0_i32 = arith.constant 0 : i32
    %c0_i32_0 = arith.constant 0 : i32
    return %arg0, %c0_i32 : i32, i32
  }
  func.func @transform_1(%arg0: i32) -> (i32, i32) {
    %c0_i32 = arith.constant 0 : i32
    %c0_i32_0 = arith.constant 0 : i32
    %c0_i32_1 = arith.constant 0 : i32
    return %c0_i32, %c0_i32_0 : i32, i32
  }
  func.func @transform_2(%arg0: i32) -> (i32, i32) {
    %c0_i32 = arith.constant 0 : i32
    %c0_i32_0 = arith.constant 0 : i32
    %c0_i32_1 = arith.constant 0 : i32
    return %c0_i32, %c0_i32_0 : i32, i32
  }
  func.func @transform_3(%arg0: i32) -> (i32, i32) {
    %c0_i32 = arith.constant 0 : i32
    %c0_i32_0 = arith.constant 0 : i32
    %c0_i32_1 = arith.constant 0 : i32
    return %c0_i32, %c0_i32_0 : i32, i32
  }
  func.func @transform_4(%arg0: i32) -> (i32, i32) {
    %c0_i32 = arith.constant 0 : i32
    %c0_i32_0 = arith.constant 0 : i32
    %c0_i32_1 = arith.constant 0 : i32
    return %c0_i32, %c0_i32_0 : i32, i32
  }
  func.func @transform_5(%arg0: i32) -> (i32, i32) {
    %c0_i32 = arith.constant 0 : i32
    %c0_i32_0 = arith.constant 0 : i32
    %c0_i32_1 = arith.constant 0 : i32
    return %c0_i32, %c0_i32_0 : i32, i32
  }
  func.func @transform_6(%arg0: i32) -> (i32, i32) {
    %c0_i32 = arith.constant 0 : i32
    %c0_i32_0 = arith.constant 0 : i32
    %c0_i32_1 = arith.constant 0 : i32
    return %c0_i32, %c0_i32_0 : i32, i32
  }
  func.func @transform_7(%arg0: i32) -> (i32, i32) {
    %c0_i32 = arith.constant 0 : i32
    %c0_i32_0 = arith.constant 0 : i32
    return %arg0, %c0_i32 : i32, i32
  }
  func.func @transform_8(%arg0: i32) -> (i32, i32) {
    %c0_i32 = arith.constant 0 : i32
    %c0_i32_0 = arith.constant 0 : i32
    return %arg0, %c0_i32 : i32, i32
  }
  func.func @transform_9(%arg0: i32) -> (i32, i32) {
    %c0_i32 = arith.constant 0 : i32
    %c0_i32_0 = arith.constant 0 : i32
    return %arg0, %c0_i32 : i32, i32
  }
}

</mosaic_0001>

<llo_original>
// kernel: tpu_custom_call.1
$region0: #{tpu_custom_call.1}
  #allocation0 [shape = 'u32[]', space=smem, size = 0x4, offset = 0x4, fixed_abs, tag = 'smem constant byte address 0x4 - core index']
  #allocation1 [shape = 'u32[144,128]{1,0:T(1,128)}', space=vmem, size = 0x12000, scoped, tag = 'internal scratch']
  %s0 = inlined_call_operand.vmem [shape: f32[8,32], index: 0, kind: input, shape index: {}]
  %s1 = inlined_call_operand.vmem [shape: f32[32,64], index: 1, kind: input, shape index: {}]
  %s2 = inlined_call_operand.vmem [shape: f32[1,64], index: 2, kind: input, shape index: {}]
  %s3 = inlined_call_operand.vmem [shape: f32[64,128], index: 3, kind: input, shape index: {}]
  %s4 = inlined_call_operand.vmem [shape: f32[1,128], index: 4, kind: input, shape index: {}]
  %s5 = inlined_call_operand.vmem [shape: f32[128,64], index: 5, kind: input, shape index: {}]
  %s6 = inlined_call_operand.vmem [shape: f32[1,64], index: 6, kind: input, shape index: {}]
  %s7 = inlined_call_operand.hbm [shape: f32[8,128], index: 7, kind: output, shape index: {0}]
  %s8 = inlined_call_operand.hbm [shape: f32[8,128], index: 8, kind: output, shape index: {1}]
  %s9 = inlined_call_operand.hbm [shape: f32[8,128], index: 9, kind: output, shape index: {2}]
  %10 = xla_tuple %s7, %s8, %s9
  %s11 = sld [smem:[#allocation0]]
  $region54: #{tpu_custom_call.1} parent=0
    _
  %s13 = ssub.s32 1, %s11
  %s14 = scalar_select 0, %s13, %s11
  $region1: #{tpu_custom_call.1} parent=0
    #allocation2 [shape = 'u8[4096]{0}', space=vmem, size = 0x1000, scoped, tag = 'output window, operand 0, single buffered']
    #allocation3 [shape = 's32[1]{0}', space=sflag, size = 0x4, scoped, tag = 'scoped memory for tpu_custom_call.1']
    #allocation4 [shape = 'u8[4096]{0}', space=vmem, size = 0x1000, scoped, tag = 'output window, operand 1, single buffered']
    #allocation5 [shape = 's32[1]{0}', space=sflag, size = 0x4, scoped, tag = 'scoped memory for tpu_custom_call.1']
    #allocation6 [shape = 'u8[4096]{0}', space=vmem, size = 0x1000, scoped, tag = 'output window, operand 2, single buffered']
    %15 = vsyncpa [#allocation3], 0
    %16 = vsyncpa [#allocation5], 0
    // Predicated region
    $region2: #{tpu_custom_call.1} parent=1 // pred_check
      _
    $region3: #{tpu_custom_call.1} parent=1 // pred_check_branch
      %18 = sbr.rel (0) target = $region5
    $region4: #{tpu_custom_call.1} parent=1 // pred_region
      _
    $region5: #{tpu_custom_call.1} parent=1 // pred_fallthru
      _
    // Predicated region
    $region6: #{tpu_custom_call.1} parent=1 // pred_check
      _
    $region7: #{tpu_custom_call.1} parent=1 // pred_check_branch
      %20 = sbr.rel (0) target = $region9
    $region8: #{tpu_custom_call.1} parent=1 // pred_region
      _
    $region9: #{tpu_custom_call.1} parent=1 // pred_fallthru
      _
    // Predicated region
    $region10: #{tpu_custom_call.1} parent=1 // pred_check
      _
    $region11: #{tpu_custom_call.1} parent=1 // pred_check_branch
      %22 = sbr.rel (0) target = $region13
    $region12: #{tpu_custom_call.1} parent=1 // pred_region
      _
    $region13: #{tpu_custom_call.1} parent=1 // pred_fallthru
      _
    // Predicated region
    $region14: #{tpu_custom_call.1} parent=1 // pred_check
      _
    $region15: #{tpu_custom_call.1} parent=1 // pred_check_branch
      %24 = sbr.rel (0) target = $region17
    $region16: #{tpu_custom_call.1} parent=1 // pred_region
      _
    $region17: #{tpu_custom_call.1} parent=1 // pred_fallthru
      _
    // Predicated region
    $region18: #{tpu_custom_call.1} parent=1 // pred_check
      _
    $region19: #{tpu_custom_call.1} parent=1 // pred_check_branch
      %26 = sbr.rel (0) target = $region21
    $region20: #{tpu_custom_call.1} parent=1 // pred_region
      _
    $region21: #{tpu_custom_call.1} parent=1 // pred_fallthru
      _
    // Predicated region
    $region22: #{tpu_custom_call.1} parent=1 // pred_check
      _
    $region23: #{tpu_custom_call.1} parent=1 // pred_check_branch
      %28 = sbr.rel (0) target = $region25
    $region24: #{tpu_custom_call.1} parent=1 // pred_region
      _
    $region25: #{tpu_custom_call.1} parent=1 // pred_fallthru
      _
    // Predicated region
    $region26: #{tpu_custom_call.1} parent=1 // pred_check
      _
    $region27: #{tpu_custom_call.1} parent=1 // pred_check_branch
      %30 = sbr.rel (0) target = $region29
    $region28: #{tpu_custom_call.1} parent=1 // pred_region
      _
    $region29: #{tpu_custom_call.1} parent=1 // pred_fallthru
      _
    %v31 = vld [vmem:[%s0] sm:$0xff]
    %v32 = vld [vmem:[%s2] sm:$0x1]
    %v33 = vld [vmem:[%s4] sm:$0x1]
    %v34 = vld [vmem:[%s6] sm:$0x1]
    %v35 = vld [vmem:[%s1] sm:$0xff]
    %v36 = vld [vmem:[%s1 + $0x8] sm:$0xff]
    %v37 = vld [vmem:[%s1 + $0x10] sm:$0xff]
    %v38 = vld [vmem:[%s1 + $0x18] sm:$0xff]
    %v40 = vlaneseq
    %v41 = vshrl.u32 %v40, 7
    %v42 = vsub.s32 0, %v41
    %v43 = vrot.slane %v32, %v42
    %vm45 = vcmask 261120
    %v47 = vsel %vm45, %v31, 0
    %49 = vmatprep.subr.mxu0 0.0
    %50 = vmatpush1.msra.mxu0 %v35
    %51 = vmatprep.subr.mxu0 0.0
    %52 = vmatpush1.msra.mxu0 %v36
    %53 = vmatprep.subr.mxu0 0.0
    %54 = vmatpush1.msra.mxu0 %v37
    %55 = vmatprep.subr.mxu0 0.0
    %56 = vmatpush1.msra.mxu0 %v38
    %57 = vmatprep.subr.mxu0 0.0
    %58 = vmatpush1.msra.mxu0 0.0
    %59 = vmatprep.subr.mxu0 0.0
    %60 = vmatpush1.msra.mxu0 0.0
    %61 = vmatprep.subr.mxu0 0.0
    %62 = vmatpush1.msra.mxu0 0.0
    %63 = vmatprep.subr.mxu0 0.0
    %64 = vmatpush1.msra.mxu0 0.0
    %65 = vmatprep.subr.mxu0 0.0
    %66 = vmatpush1.msra.mxu0 0.0
    %67 = vmatprep.subr.mxu0 0.0
    %68 = vmatpush1.msra.mxu0 0.0
    %69 = vmatprep.subr.mxu0 0.0
    %70 = vmatpush1.msra.mxu0 0.0
    %71 = vmatprep.subr.mxu0 0.0
    %72 = vmatpush1.msra.mxu0 0.0
    %73 = vmatprep.subr.mxu0 0.0
    %74 = vmatpush1.msra.mxu0 0.0
    %75 = vmatprep.subr.mxu0 0.0
    %76 = vmatpush1.msra.mxu0 0.0
    %77 = vmatprep.subr.mxu0 0.0
    %78 = vmatpush1.msra.mxu0 0.0
    %79 = vmatprep.subr.mxu0 0.0
    %80 = vmatpush1.msra.mxu0 0.0
    %81 = vmatprep.subr.mxu0 0.0
    %82 = vmatpush1.msra.mxu0 0.0
    %83 = vmatprep.subr.mxu0 0.0
    %84 = vmatpush1.msra.mxu0 0.0
    %85 = vmatprep.subr.mxu0 0.0
    %86 = vmatpush1.msra.mxu0 0.0
    %87 = vmatprep.subr.mxu0 0.0
    %88 = vmatpush1.msra.mxu0 0.0
    %89 = vmatprep.subr.mxu0 0.0
    %90 = vmatpush1.msra.mxu0 0.0
    %91 = vmatprep.subr.mxu0 0.0
    %92 = vmatpush1.msra.mxu0 0.0
    %93 = vmatprep.subr.mxu0 0.0
    %94 = vmatpush1.msra.mxu0 0.0
    %95 = vmatprep.subr.mxu0 0.0
    %96 = vmatpush1.msra.mxu0 0.0
    %97 = vmatprep.subr.mxu0 0.0
    %98 = vmatpush1.msra.mxu0 0.0
    %99 = vmatprep.subr.mxu0 0.0
    %100 = vmatpush1.msra.mxu0 0.0
    %101 = vmatprep.subr.mxu0 0.0
    %102 = vmatpush1.msra.mxu0 0.0
    %103 = vmatprep.subr.mxu0 0.0
    %104 = vmatpush1.msra.mxu0 0.0
    %105 = vmatprep.subr.mxu0 0.0
    %106 = vmatpush1.msra.mxu0 0.0
    %107 = vmatprep.subr.mxu0 0.0
    %108 = vmatpush1.msra.mxu0 0.0
    %109 = vmatprep.subr.mxu0 0.0
    %110 = vmatpush1.msra.mxu0 0.0
    %111 = vmatprep.subr.mxu0 0.0
    %112 = vmatpush1.msra.mxu0 0.0
    %113 = vmatprep.mubr.f32.mxu0 0.0
    %114 = vmatmul.mubr.f32.gmra.mrb[0].mxu0 %v47
    %v115 = vpop.f32.mrb[0].mxu0
    %v116 = vadd.f32 %v43, %v115
    %v117 = vpop.f32.mrb[0].mxu0
    %118 = vdwg.mxu0
    %vm119 = vcmask 523264
    %v120 = vsel %vm119, %v116, 0.0
    %121 = vst [vmem:[#allocation2] sm:$0xff] %v120
    %vm122 = vcmp.ge.f32.partialorder %v116, 0.0
    %v123 = vmul.f32 %v116, 0.01
    %v124 = vsel %vm122, %v116, %v123
    %v125 = vld [vmem:[%s3] sm:$0xff]
    %v126 = vld [vmem:[%s3 + $0x8] sm:$0xff]
    %v127 = vld [vmem:[%s3 + $0x10] sm:$0xff]
    %v128 = vld [vmem:[%s3 + $0x18] sm:$0xff]
    %v129 = vld [vmem:[%s3 + $0x20] sm:$0xff]
    %v130 = vld [vmem:[%s3 + $0x28] sm:$0xff]
    %v131 = vld [vmem:[%s3 + $0x30] sm:$0xff]
    %v132 = vld [vmem:[%s3 + $0x38] sm:$0xff]
    %v134 = vlaneseq
    %v135 = vshrl.u32 %v134, 7
    %v136 = vsub.s32 0, %v135
    %v137 = vrot.slane %v33, %v136
    %v140 = vsel %vm119, %v124, 0
    %142 = vmatprep.subr.mxu0 0.0
    %143 = vmatpush1.msra.mxu0 %v125
    %144 = vmatprep.subr.mxu0 0.0
    %145 = vmatpush1.msra.mxu0 %v126
    %146 = vmatprep.subr.mxu0 0.0
    %147 = vmatpush1.msra.mxu0 %v127
    %148 = vmatprep.subr.mxu0 0.0
    %149 = vmatpush1.msra.mxu0 %v128
    %150 = vmatprep.subr.mxu0 0.0
    %151 = vmatpush1.msra.mxu0 %v129
    %152 = vmatprep.subr.mxu0 0.0
    %153 = vmatpush1.msra.mxu0 %v130
    %154 = vmatprep.subr.mxu0 0.0
    %155 = vmatpush1.msra.mxu0 %v131
    %156 = vmatprep.subr.mxu0 0.0
    %157 = vmatpush1.msra.mxu0 %v132
    %158 = vmatprep.subr.mxu0 0.0
    %159 = vmatpush1.msra.mxu0 0.0
    %160 = vmatprep.subr.mxu0 0.0
    %161 = vmatpush1.msra.mxu0 0.0
    %162 = vmatprep.subr.mxu0 0.0
    %163 = vmatpush1.msra.mxu0 0.0
    %164 = vmatprep.subr.mxu0 0.0
    %165 = vmatpush1.msra.mxu0 0.0
    %166 = vmatprep.subr.mxu0 0.0
    %167 = vmatpush1.msra.mxu0 0.0
    %168 = vmatprep.subr.mxu0 0.0
    %169 = vmatpush1.msra.mxu0 0.0
    %170 = vmatprep.subr.mxu0 0.0
    %171 = vmatpush1.msra.mxu0 0.0
    %172 = vmatprep.subr.mxu0 0.0
    %173 = vmatpush1.msra.mxu0 0.0
    %174 = vmatprep.subr.mxu0 0.0
    %175 = vmatpush1.msra.mxu0 0.0
    %176 = vmatprep.subr.mxu0 0.0
    %177 = vmatpush1.msra.mxu0 0.0
    %178 = vmatprep.subr.mxu0 0.0
    %179 = vmatpush1.msra.mxu0 0.0
    %180 = vmatprep.subr.mxu0 0.0
    %181 = vmatpush1.msra.mxu0 0.0
    %182 = vmatprep.subr.mxu0 0.0
    %183 = vmatpush1.msra.mxu0 0.0
    %184 = vmatprep.subr.mxu0 0.0
    %185 = vmatpush1.msra.mxu0 0.0
    %186 = vmatprep.subr.mxu0 0.0
    %187 = vmatpush1.msra.mxu0 0.0
    %188 = vmatprep.subr.mxu0 0.0
    %189 = vmatpush1.msra.mxu0 0.0
    %190 = vmatprep.subr.mxu0 0.0
    %191 = vmatpush1.msra.mxu0 0.0
    %192 = vmatprep.subr.mxu0 0.0
    %193 = vmatpush1.msra.mxu0 0.0
    %194 = vmatprep.subr.mxu0 0.0
    %195 = vmatpush1.msra.mxu0 0.0
    %196 = vmatprep.subr.mxu0 0.0
    %197 = vmatpush1.msra.mxu0 0.0
    %198 = vmatprep.subr.mxu0 0.0
    %199 = vmatpush1.msra.mxu0 0.0
    %200 = vmatprep.subr.mxu0 0.0
    %201 = vmatpush1.msra.mxu0 0.0
    %202 = vmatprep.subr.mxu0 0.0
    %203 = vmatpush1.msra.mxu0 0.0
    %204 = vmatprep.subr.mxu0 0.0
    %205 = vmatpush1.msra.mxu0 0.0
    %206 = vmatprep.mubr.f32.mxu0 0.0
    %207 = vmatmul.mubr.f32.gmra.mrb[0].mxu0 %v140
    %v208 = vpop.f32.mrb[0].mxu0
    %v209 = vadd.f32 %v137, %v208
    %v210 = vpop.f32.mrb[0].mxu0
    %211 = vdwg.mxu0
    %212 = vst [vmem:[#allocation4] sm:$0xff] %v209
    %vm213 = vcmp.ge.f32.partialorder %v209, 0.0
    %v214 = vmul.f32 %v209, 0.01
    %v215 = vsel %vm213, %v209, %v214
    %v216 = vld [vmem:[%s5] sm:$0xff]
    %v217 = vld [vmem:[%s5 + $0x8] sm:$0xff]
    %v218 = vld [vmem:[%s5 + $0x10] sm:$0xff]
    %v219 = vld [vmem:[%s5 + $0x18] sm:$0xff]
    %v220 = vld [vmem:[%s5 + $0x20] sm:$0xff]
    %v221 = vld [vmem:[%s5 + $0x28] sm:$0xff]
    %v222 = vld [vmem:[%s5 + $0x30] sm:$0xff]
    %v223 = vld [vmem:[%s5 + $0x38] sm:$0xff]
    %v224 = vld [vmem:[%s5 + $0x40] sm:$0xff]
    %v225 = vld [vmem:[%s5 + $0x48] sm:$0xff]
    %v226 = vld [vmem:[%s5 + $0x50] sm:$0xff]
    %v227 = vld [vmem:[%s5 + $0x58] sm:$0xff]
    %v228 = vld [vmem:[%s5 + $0x60] sm:$0xff]
    %v229 = vld [vmem:[%s5 + $0x68] sm:$0xff]
    %v230 = vld [vmem:[%s5 + $0x70] sm:$0xff]
    %v231 = vld [vmem:[%s5 + $0x78] sm:$0xff]
    %v233 = vlaneseq
    %v234 = vshrl.u32 %v233, 7
    %v235 = vsub.s32 0, %v234
    %v236 = vrot.slane %v34, %v235
    %238 = vmatprep.subr.mxu0 0.0
    %239 = vmatpush1.msra.mxu0 %v216
    %240 = vmatprep.subr.mxu0 0.0
    %241 = vmatpush1.msra.mxu0 %v217
    %242 = vmatprep.subr.mxu0 0.0
    %243 = vmatpush1.msra.mxu0 %v218
    %244 = vmatprep.subr.mxu0 0.0
    %245 = vmatpush1.msra.mxu0 %v219
    %246 = vmatprep.subr.mxu0 0.0
    %247 = vmatpush1.msra.mxu0 %v220
    %248 = vmatprep.subr.mxu0 0.0
    %249 = vmatpush1.msra.mxu0 %v221
    %250 = vmatprep.subr.mxu0 0.0
    %251 = vmatpush1.msra.mxu0 %v222
    %252 = vmatprep.subr.mxu0 0.0
    %253 = vmatpush1.msra.mxu0 %v223
    %254 = vmatprep.subr.mxu0 0.0
    %255 = vmatpush1.msra.mxu0 %v224
    %256 = vmatprep.subr.mxu0 0.0
    %257 = vmatpush1.msra.mxu0 %v225
    %258 = vmatprep.subr.mxu0 0.0
    %259 = vmatpush1.msra.mxu0 %v226
    %260 = vmatprep.subr.mxu0 0.0
    %261 = vmatpush1.msra.mxu0 %v227
    %262 = vmatprep.subr.mxu0 0.0
    %263 = vmatpush1.msra.mxu0 %v228
    %264 = vmatprep.subr.mxu0 0.0
    %265 = vmatpush1.msra.mxu0 %v229
    %266 = vmatprep.subr.mxu0 0.0
    %267 = vmatpush1.msra.mxu0 %v230
    %268 = vmatprep.subr.mxu0 0.0
    %269 = vmatpush1.msra.mxu0 %v231
    %270 = vmatprep.subr.mxu0 0.0
    %271 = vmatpush1.msra.mxu0 0.0
    %272 = vmatprep.subr.mxu0 0.0
    %273 = vmatpush1.msra.mxu0 0.0
    %274 = vmatprep.subr.mxu0 0.0
    %275 = vmatpush1.msra.mxu0 0.0
    %276 = vmatprep.subr.mxu0 0.0
    %277 = vmatpush1.msra.mxu0 0.0
    %278 = vmatprep.subr.mxu0 0.0
    %279 = vmatpush1.msra.mxu0 0.0
    %280 = vmatprep.subr.mxu0 0.0
    %281 = vmatpush1.msra.mxu0 0.0
    %282 = vmatprep.subr.mxu0 0.0
    %283 = vmatpush1.msra.mxu0 0.0
    %284 = vmatprep.subr.mxu0 0.0
    %285 = vmatpush1.msra.mxu0 0.0
    %286 = vmatprep.subr.mxu0 0.0
    %287 = vmatpush1.msra.mxu0 0.0
    %288 = vmatprep.subr.mxu0 0.0
    %289 = vmatpush1.msra.mxu0 0.0
    %290 = vmatprep.subr.mxu0 0.0
    %291 = vmatpush1.msra.mxu0 0.0
    %292 = vmatprep.subr.mxu0 0.0
    %293 = vmatpush1.msra.mxu0 0.0
    %294 = vmatprep.subr.mxu0 0.0
    %295 = vmatpush1.msra.mxu0 0.0
    %296 = vmatprep.subr.mxu0 0.0
    %297 = vmatpush1.msra.mxu0 0.0
    %298 = vmatprep.subr.mxu0 0.0
    %299 = vmatpush1.msra.mxu0 0.0
    %300 = vmatprep.subr.mxu0 0.0
    %301 = vmatpush1.msra.mxu0 0.0
    %302 = vmatprep.mubr.f32.mxu0 0.0
    %303 = vmatmul.mubr.f32.gmra.mrb[0].mxu0 %v215
    %v304 = vpop.f32.mrb[0].mxu0
    %v305 = vadd.f32 %v236, %v304
    %v306 = vpop.f32.mrb[0].mxu0
    %307 = vdwg.mxu0
    %v308 = vsel %vm119, %v305, 0.0
    %309 = vst [vmem:[#allocation6] sm:$0xff] %v308
    // Predicated region
    $region30: #{tpu_custom_call.1} parent=1 // pred_check
      _
    $region31: #{tpu_custom_call.1} parent=1 // pred_check_branch
      %311 = sbr.rel (0) target = $region33
    $region32: #{tpu_custom_call.1} parent=1 // pred_region
      %s313 = ssub.s32 128, 128
      %314 = vsyncadd [#allocation3], %s313
      %s316 = sshll.u32 [#allocation2], 4
      %s317 = int_to_ptr.vmem [resolvable:$true] %s316
      %319 = dma.vmem_to_hbm [thread:$0]  %s317, 128, %s7, [#allocation3]
    $region33: #{tpu_custom_call.1} parent=1 // pred_fallthru
      _
    // Predicated region
    $region34: #{tpu_custom_call.1} parent=1 // pred_check
      _
    $region35: #{tpu_custom_call.1} parent=1 // pred_check_branch
      %321 = sbr.rel (0) target = $region37
    $region36: #{tpu_custom_call.1} parent=1 // pred_region
      %s323 = ssub.s32 128, 128
      %324 = vsyncadd [#allocation5], %s323
      %s326 = sshll.u32 [#allocation4], 4
      %s327 = int_to_ptr.vmem [resolvable:$true] %s326
      %329 = dma.vmem_to_hbm [thread:$0]  %s327, 128, %s8, [#allocation5]
    $region37: #{tpu_custom_call.1} parent=1 // pred_fallthru
      _
    // Predicated region
    $region38: #{tpu_custom_call.1} parent=1 // pred_check
      _
    $region39: #{tpu_custom_call.1} parent=1 // pred_check_branch
      %331 = sbr.rel (0) target = $region41
    $region40: #{tpu_custom_call.1} parent=1 // pred_region
      %s333 = ssub.s32 128, 128
      %334 = vsyncadd [#allocation5], %s333
      %s336 = sshll.u32 [#allocation6], 4
      %s337 = int_to_ptr.vmem [resolvable:$true] %s336
      %339 = dma.vmem_to_hbm [thread:$0]  %s337, 128, %s9, [#allocation5]
    $region41: #{tpu_custom_call.1} parent=1 // pred_fallthru
      _
    // Predicated region
    $region42: #{tpu_custom_call.1} parent=1 // pred_check
      _
    $region43: #{tpu_custom_call.1} parent=1 // pred_check_branch
      %341 = sbr.rel (0) target = $region45
    $region44: #{tpu_custom_call.1} parent=1 // pred_region
      %342 = dma.done [#allocation3], 128
    $region45: #{tpu_custom_call.1} parent=1 // pred_fallthru
      _
    // Predicated region
    $region46: #{tpu_custom_call.1} parent=1 // pred_check
      _
    $region47: #{tpu_custom_call.1} parent=1 // pred_check_branch
      %344 = sbr.rel (0) target = $region49
    $region48: #{tpu_custom_call.1} parent=1 // pred_region
      %345 = dma.done [#allocation5], 128
    $region49: #{tpu_custom_call.1} parent=1 // pred_fallthru
      _
    // Predicated region
    $region50: #{tpu_custom_call.1} parent=1 // pred_check
      _
    $region51: #{tpu_custom_call.1} parent=1 // pred_check_branch
      %347 = sbr.rel (0) target = $region53
    $region52: #{tpu_custom_call.1} parent=1 // pred_region
      %348 = dma.done [#allocation5], 128
    $region53: #{tpu_custom_call.1} parent=1 // pred_fallthru
      _
    %349 = vsyncpa [#allocation3], 1
    %350 = vsyncpa [#allocation5], 1

</llo_original>
